<compile_context>
chip_gen: v7x
topology: tpu7x:2x2x1
jax: 0.10.0
libtpu: 0.0.40
codegen_flags: <defaults>
</compile_context>

<pallas_src>
import functools

import jax
import jax.numpy as jnp
from jax.experimental import pallas as pl
from jax.experimental.pallas import tpu as pltpu

_EPS = 1e-5


def _round_up(x, m):
    return (x + m - 1) // m * m


def _tpu_generation_info():
    """Return (generation, per-core VMEM capacity in bytes); conservative fallback."""
    try:
        kind = jax.devices()[0].device_kind.lower()
    except Exception:
        kind = ""
    if "v7" in kind:
        return 7, 64 * 1024 * 1024
    if "v6" in kind:
        return 6, 128 * 1024 * 1024
    if "v5" in kind:
        return 5, 128 * 1024 * 1024
    return 0, 64 * 1024 * 1024          # unknown generation: be conservative


def _pad_feature(f, lane_align):
    """Lane-dense padding: 128 always; 256 on 256x256-MXU chips when the
    128-padded size would be an odd multiple of 128."""
    p = _round_up(f, 128)
    if lane_align == 256 and p % 256 != 0 and f > 128:
        p = _round_up(f, 256)
    return p


def _vmem_estimate(tm, fin_p, fp, out_bytes):
    """Rough VMEM footprint (bytes) for one grid step of this kernel."""
    x_buf = 2 * tm * fin_p * 4                       # f32 x tile, double-buffered
    o_buf = 2 * tm * fp * out_bytes                  # out tile, double-buffered
    w_buf = 2 * (fin_p * (2 * fp) * 2                # [fc1'|shortcut'] bf16
                 + fp * fp * 2                       # fc2' bf16
                 + (2 * fp) * 4 + fp * 4)            # folded shifts f32
    inter = tm * fin_p * 2 + 3 * tm * fp * 4         # bf16(x) + h/sc/o f32 temps
    return x_buf + o_buf + w_buf + inter


def _pick_tm(n, fin_p, fp, out_bytes, budget, tm_max):
    """Pick the batch tile: fits the VMEM budget, minimal batch padding,
    tie-break toward larger tiles (fewer grid steps)."""
    n16 = _round_up(max(n, 1), 16)
    if n16 < 128:
        cands = [n16]                                # whole (small) batch in one tile
    else:
        cands = [c for c in (512, 256, 128) if c <= tm_max] or [128]
    fitting = [c for c in cands if _vmem_estimate(c, fin_p, fp, out_bytes) <= budget]
    if not fitting:                                  # very large feature dims: shrink TM
        fitting = [c for c in (64, 32, 16)
                   if _vmem_estimate(c, fin_p, fp, out_bytes) <= budget] or [16]
    return min(fitting, key=lambda c: (_round_up(n16, c), -c))


def _fold_linear_bn(w, b, gamma, beta, mean, var):
    """Fold Linear(bias) + BatchNorm1d(running stats) into (w', t'): y = x @ w' + t'."""
    s = gamma / jnp.sqrt(var + _EPS)      # per-output-feature scale
    t = beta - mean * s                   # per-output-feature shift
    return w * s[None, :], b * s + t


def _basic_block_kernel(x_ref, wa_ref, ta_ref, w2_ref, t2_ref, o_ref, *, fp):
    """x_ref:(TM,Fin_p) f32; wa_ref:(Fin_p,2*Fp) bf16 = [fc1'|shortcut'];
    ta_ref:(1,2*Fp) f32; w2_ref:(Fp,Fp) bf16; t2_ref:(1,Fp) f32; o_ref:(TM,Fp)."""
    # cast activations in-kernel (saves a full wrapper-side HBM pass over x)
    x = x_ref[...].astype(wa_ref.dtype)

    # fc1 -> bn1 (folded) -> relu.  The combined weight is sliced on the *ref*
    # at a 128-aligned static column, so no (TM, 2*Fp) f32 value copy exists.
    h = jnp.dot(x, wa_ref[:, :fp],
                preferred_element_type=jnp.float32) + ta_ref[:, :fp]
    h = jnp.maximum(h, 0.0)

    # shortcut Linear -> BN (folded)
    sc = jnp.dot(x, wa_ref[:, fp:2 * fp],
                 preferred_element_type=jnp.float32) + ta_ref[:, fp:2 * fp]

    # dropout: identity in eval mode
    # fc2 -> bn2 (folded); bf16 MXU inputs, f32 accumulation
    o = jnp.dot(h.astype(w2_ref.dtype), w2_ref[...],
                preferred_element_type=jnp.float32) + t2_ref[...]

    # residual add + relu, single fused store
    o_ref[...] = jnp.maximum(o + sc, 0.0).astype(o_ref.dtype)


def basic_block_forward(x, params, *, out_dtype=jnp.float32, tm_max=512):
    """x: (N, Fin) float32. params: dict of weights (see init_params).
    out_dtype=jnp.bfloat16 halves output writeback if downstream accepts it."""
    N, Fin = x.shape
    Fout = params["w1"].shape[1]

    gen, vmem_cap = _tpu_generation_info()
    lane_align = 256 if gen >= 6 else 128

    # --- fold BN + bias into weights (wrapper-side, done once) --------------
    w1f, t1f = _fold_linear_bn(params["w1"], params["b1"],
                               params["bn1_gamma"], params["bn1_beta"],
                               params["bn1_mean"], params["bn1_var"])
    w2f, t2f = _fold_linear_bn(params["w2"], params["b2"],
                               params["bn2_gamma"], params["bn2_beta"],
                               params["bn2_mean"], params["bn2_var"])
    wsf, tsf = _fold_linear_bn(params["ws"], params["bs"],
                               params["bns_gamma"], params["bns_beta"],
                               params["bns_mean"], params["bns_var"])

    # --- lane-dense padding & tile selection ---------------------------------
    Fp = _pad_feature(Fout, lane_align)
    Fin_p = _pad_feature(Fin, lane_align)
    out_bytes = jnp.dtype(out_dtype).itemsize
    vmem_budget = int(0.7 * vmem_cap)
    TM = _pick_tm(N, Fin_p, Fp, out_bytes, vmem_budget, tm_max)
    Np = _round_up(max(N, 1), TM)

    def pad2(a, r, c):
        return jnp.pad(a, ((0, r - a.shape[0]), (0, c - a.shape[1])))

    # combined first-stage weight [fc1' | shortcut'] -> (Fin_p, 2*Fp), bf16
    wa = jnp.concatenate([pad2(w1f, Fin_p, Fp), pad2(wsf, Fin_p, Fp)],
                         axis=1).astype(jnp.bfloat16)
    ta = jnp.concatenate([jnp.pad(t1f, (0, Fp - Fout)),
                          jnp.pad(tsf, (0, Fp - Fout))]
                         ).reshape(1, 2 * Fp).astype(jnp.float32)
    w2p = pad2(w2f, Fp, Fp).astype(jnp.bfloat16)
    t2p = jnp.pad(t2f, (0, Fp - Fout)).reshape(1, Fp).astype(jnp.float32)
    xp = pad2(x, Np, Fin_p).astype(jnp.float32)   # stays f32; cast happens in-kernel

    grid = (Np // TM,)
    flops = 2 * Np * (Fin_p * 2 * Fp + Fp * Fp)
    bytes_accessed = (xp.size * 4 + wa.size * 2 + w2p.size * 2
                      + ta.size * 4 + t2p.size * 4 + Np * Fp * out_bytes)
    vmem_limit = int(min(vmem_cap,
                         max(int(1.5 * _vmem_estimate(TM, Fin_p, Fp, out_bytes)),
                             32 * 1024 * 1024)))

    # TODO(synk): very large feature dims (resident weights > ~1/3 VMEM, esp.
    #             v7x's 64 MiB) would need K-axis weight streaming
    #             (pltpu.emit_pipeline) instead of the resident-weight design.
    # TODO(synk): optional weight quantization (int8 on v5e/v6e, fp8 on v7x)
    #             is not implemented.

    out = pl.pallas_call(
        functools.partial(_basic_block_kernel, fp=Fp),
        out_shape=jax.ShapeDtypeStruct((Np, Fp), out_dtype),
        grid=grid,
        in_specs=[
            pl.BlockSpec((TM, Fin_p), lambda i: (i, 0)),      # x: row-tiled, f32
            pl.BlockSpec((Fin_p, 2 * Fp), lambda i: (0, 0)),  # [w1'|ws']: resident
            pl.BlockSpec((1, 2 * Fp), lambda i: (0, 0)),      # folded shifts
            pl.BlockSpec((Fp, Fp), lambda i: (0, 0)),         # w2': resident
            pl.BlockSpec((1, Fp), lambda i: (0, 0)),          # folded shift
        ],
        out_specs=pl.BlockSpec((TM, Fp), lambda i: (i, 0)),
        compiler_params=pltpu.CompilerParams(
            dimension_semantics=("parallel",),
            vmem_limit_bytes=vmem_limit),
        cost_estimate=pl.CostEstimate(
            flops=flops, transcendentals=0, bytes_accessed=bytes_accessed),
    )(xp, wa, ta, w2p, t2p)

    return out[:N, :Fout]


def init_params(key, in_features, out_features):
    ks = jax.random.split(key, 8)
    scale1 = 1.0 / jnp.sqrt(in_features)
    scale2 = 1.0 / jnp.sqrt(out_features)
    p = {
        # PyTorch Linear stores weight as (out, in); we keep (in, out).
        "w1": jax.random.uniform(ks[0], (in_features, out_features),
                                 minval=-scale1, maxval=scale1),
        "b1": jax.random.uniform(ks[1], (out_features,),
                                 minval=-scale1, maxval=scale1),
        "w2": jax.random.uniform(ks[2], (out_features, out_features),
                                 minval=-scale2, maxval=scale2),
        "b2": jax.random.uniform(ks[3], (out_features,),
                                 minval=-scale2, maxval=scale2),
        # shortcut Linear (in_features != out_features case)
        "ws": jax.random.uniform(ks[4], (in_features, out_features),
                                 minval=-scale1, maxval=scale1),
        "bs": jax.random.uniform(ks[5], (out_features,),
                                 minval=-scale1, maxval=scale1),
        # BatchNorm1d affine + running stats (PyTorch init for stats).
        "bn1_gamma": 1.0 + 0.1 * jax.random.normal(ks[6], (out_features,)),
        "bn1_beta": 0.1 * jax.random.normal(ks[7], (out_features,)),
        "bn1_mean": jnp.zeros((out_features,)),
        "bn1_var": jnp.ones((out_features,)),
        "bn2_gamma": jnp.ones((out_features,)),
        "bn2_beta": jnp.zeros((out_features,)),
        "bn2_mean": jnp.zeros((out_features,)),
        "bn2_var": jnp.ones((out_features,)),
        "bns_gamma": jnp.ones((out_features,)),
        "bns_beta": jnp.zeros((out_features,)),
        "bns_mean": jnp.zeros((out_features,)),
        "bns_var": jnp.ones((out_features,)),
    }
    return {k: v.astype(jnp.float32) for k, v in p.items()}


def reference_forward_f32(x, params):
    """Full-precision eval-mode PyTorch semantics (unfolded)."""
    def bn(y, g, b, m, v):
        return (y - m) / jnp.sqrt(v + _EPS) * g + b

    h = x @ params["w1"] + params["b1"]
    h = jnp.maximum(bn(h, params["bn1_gamma"], params["bn1_beta"],
                       params["bn1_mean"], params["bn1_var"]), 0.0)
    o = h @ params["w2"] + params["b2"]
    o = bn(o, params["bn2_gamma"], params["bn2_beta"],
           params["bn2_mean"], params["bn2_var"])
    sc = x @ params["ws"] + params["bs"]
    sc = bn(sc, params["bns_gamma"], params["bns_beta"],
            params["bns_mean"], params["bns_var"])
    return jnp.maximum(o + sc, 0.0)


def reference_forward_bf16(x, params):
    """Emulates kernel numerics (folded params, bf16 matmul inputs, f32 acc)."""
    w1f, t1f = _fold_linear_bn(params["w1"], params["b1"],
                               params["bn1_gamma"], params["bn1_beta"],
                               params["bn1_mean"], params["bn1_var"])
    w2f, t2f = _fold_linear_bn(params["w2"], params["b2"],
                               params["bn2_gamma"], params["bn2_beta"],
                               params["bn2_mean"], params["bn2_var"])
    wsf, tsf = _fold_linear_bn(params["ws"], params["bs"],
                               params["bns_gamma"], params["bns_beta"],
                               params["bns_mean"], params["bns_var"])
    bf = lambda a: a.astype(jnp.bfloat16)
    h = jnp.dot(bf(x), bf(w1f), preferred_element_type=jnp.float32) + t1f
    h = jnp.maximum(h, 0.0)
    o = jnp.dot(bf(h), bf(w2f), preferred_element_type=jnp.float32) + t2f
    sc = jnp.dot(bf(x), bf(wsf), preferred_element_type=jnp.float32) + tsf
    return jnp.maximum(o + sc, 0.0)


if __name__ == "__main__":
    key = jax.random.PRNGKey(0)
    k_x, k_p = jax.random.split(key)

    N, Fin, Fout = 8, 32, 64        # small shapes; Fin != Fout exercises shortcut
    x = jax.random.normal(k_x, (N, Fin), dtype=jnp.float32)
    params = init_params(k_p, Fin, Fout)

    out = basic_block_forward(x, params)
    out = jax.block_until_ready(out)
    assert out.shape == (N, Fout)

    # Tight check vs. a reference that mirrors the kernel's bf16 numerics.
    ref_bf16 = reference_forward_bf16(x, params)
    assert jnp.allclose(out, ref_bf16, atol=1e-3, rtol=1e-3), \
        "mismatch vs bf16-emulating reference"

    # Loose check vs. full-f32 PyTorch eval-mode semantics (bf16 quantization).
    ref_f32 = reference_forward_f32(x, params)
    assert jnp.allclose(out, ref_f32, atol=5e-2, rtol=5e-2), \
        "mismatch vs f32 reference"

    print("KERNEL_OK")
</pallas_src>

<mosaic_0001>
module attributes {stable_mosaic.version = 11 : i64} {
  func.func @_basic_block_kernel(%arg0: i32, %arg1: memref<16x128xf32, #tpu.memory_space<vmem>>, %arg2: memref<128x256xbf16, #tpu.memory_space<vmem>>, %arg3: memref<1x256xf32, #tpu.memory_space<vmem>>, %arg4: memref<128x128xbf16, #tpu.memory_space<vmem>>, %arg5: memref<1x128xf32, #tpu.memory_space<vmem>>, %arg6: memref<16x128xf32, #tpu.memory_space<vmem>>) attributes {dimension_semantics = [#tpu.dimension_semantics<parallel>], iteration_bounds = array<i64: 1>, scalar_prefetch = 0 : i64, scratch_operands = 0 : i64, tpu.core_type = #tpu.core_type<tc>, window_params = [{transform_indices = @transform_0, window_bounds = array<i64: 16, 128>}, {pipeline_mode = #tpu.pipeline_mode<synchronous>, transform_indices = @transform_1, window_bounds = array<i64: 128, 256>}, {pipeline_mode = #tpu.pipeline_mode<synchronous>, transform_indices = @transform_2, window_bounds = array<i64: 1, 256>}, {pipeline_mode = #tpu.pipeline_mode<synchronous>, transform_indices = @transform_3, window_bounds = array<i64: 128, 128>}, {pipeline_mode = #tpu.pipeline_mode<synchronous>, transform_indices = @transform_4, window_bounds = array<i64: 1, 128>}, {transform_indices = @transform_5, window_bounds = array<i64: 16, 128>}]} {
    %c0 = arith.constant 0 : index
    %c0_0 = arith.constant 0 : index
    %0 = vector.load %arg1[%c0, %c0_0] : memref<16x128xf32, #tpu.memory_space<vmem>>, vector<16x128xf32>
    %1 = arith.truncf %0 : vector<16x128xf32> to vector<16x128xbf16>
    %c0_1 = arith.constant 0 : index
    %c0_2 = arith.constant 0 : index
    %2 = vector.load %arg2[%c0_1, %c0_2] : memref<128x256xbf16, #tpu.memory_space<vmem>>, vector<128x128xbf16>
    %cst = arith.constant dense<0.000000e+00> : vector<16x128xf32>
    %3 = tpu.matmul %1, %2, %cst {dimension_numbers = #tpu.dot_dimension_numbers<[1], [0], [0], [1], [0, 0, 1, 1], [], []>} : vector<16x128xbf16>, vector<128x128xbf16>, vector<16x128xf32> -> vector<16x128xf32>
    %c0_3 = arith.constant 0 : index
    %c0_4 = arith.constant 0 : index
    %4 = vector.load %arg3[%c0_3, %c0_4] : memref<1x256xf32, #tpu.memory_space<vmem>>, vector<1x128xf32>
    %5 = vector.broadcast %4 : vector<1x128xf32> to vector<16x128xf32>
    %6 = arith.addf %3, %5 : vector<16x128xf32>
    %cst_5 = arith.constant 0.000000e+00 : f32
    %7 = vector.broadcast %cst_5 : f32 to vector<16x128xf32>
    %8 = arith.maximumf %6, %7 : vector<16x128xf32>
    %c0_6 = arith.constant 0 : index
    %c128 = arith.constant 128 : index
    %9 = vector.load %arg2[%c0_6, %c128] : memref<128x256xbf16, #tpu.memory_space<vmem>>, vector<128x128xbf16>
    %cst_7 = arith.constant dense<0.000000e+00> : vector<16x128xf32>
    %10 = tpu.matmul %1, %9, %cst_7 {dimension_numbers = #tpu.dot_dimension_numbers<[1], [0], [0], [1], [0, 0, 1, 1], [], []>} : vector<16x128xbf16>, vector<128x128xbf16>, vector<16x128xf32> -> vector<16x128xf32>
    %c0_8 = arith.constant 0 : index
    %c128_9 = arith.constant 128 : index
    %11 = vector.load %arg3[%c0_8, %c128_9] : memref<1x256xf32, #tpu.memory_space<vmem>>, vector<1x128xf32>
    %12 = vector.broadcast %11 : vector<1x128xf32> to vector<16x128xf32>
    %13 = arith.addf %10, %12 : vector<16x128xf32>
    %14 = arith.truncf %8 : vector<16x128xf32> to vector<16x128xbf16>
    %c0_10 = arith.constant 0 : index
    %c0_11 = arith.constant 0 : index
    %15 = vector.load %arg4[%c0_10, %c0_11] : memref<128x128xbf16, #tpu.memory_space<vmem>>, vector<128x128xbf16>
    %cst_12 = arith.constant dense<0.000000e+00> : vector<16x128xf32>
    %16 = tpu.matmul %14, %15, %cst_12 {dimension_numbers = #tpu.dot_dimension_numbers<[1], [0], [0], [1], [0, 0, 1, 1], [], []>} : vector<16x128xbf16>, vector<128x128xbf16>, vector<16x128xf32> -> vector<16x128xf32>
    %c0_13 = arith.constant 0 : index
    %c0_14 = arith.constant 0 : index
    %17 = vector.load %arg5[%c0_13, %c0_14] : memref<1x128xf32, #tpu.memory_space<vmem>>, vector<1x128xf32>
    %18 = vector.broadcast %17 : vector<1x128xf32> to vector<16x128xf32>
    %19 = arith.addf %16, %18 : vector<16x128xf32>
    %20 = arith.addf %19, %13 : vector<16x128xf32>
    %cst_15 = arith.constant 0.000000e+00 : f32
    %21 = vector.broadcast %cst_15 : f32 to vector<16x128xf32>
    %22 = arith.maximumf %20, %21 : vector<16x128xf32>
    %c0_16 = arith.constant 0 : index
    %c0_17 = arith.constant 0 : index
    %23 = vector.load %arg6[%c0_16, %c0_17] : memref<16x128xf32, #tpu.memory_space<vmem>>, vector<16x128xf32>
    tpu.vector_store %arg6[%c0_16, %c0_17], %22 {strides = array<i32>} : memref<16x128xf32, #tpu.memory_space<vmem>>, vector<16x128xf32>,
    return
  }
  func.func @transform_0(%arg0: i32) -> (i32, i32) {
    %c0_i32 = arith.constant 0 : i32
    %c0_i32_0 = arith.constant 0 : i32
    return %arg0, %c0_i32 : i32, i32
  }
  func.func @transform_1(%arg0: i32) -> (i32, i32) {
    %c0_i32 = arith.constant 0 : i32
    %c0_i32_0 = arith.constant 0 : i32
    %c0_i32_1 = arith.constant 0 : i32
    return %c0_i32, %c0_i32_0 : i32, i32
  }
  func.func @transform_2(%arg0: i32) -> (i32, i32) {
    %c0_i32 = arith.constant 0 : i32
    %c0_i32_0 = arith.constant 0 : i32
    %c0_i32_1 = arith.constant 0 : i32
    return %c0_i32, %c0_i32_0 : i32, i32
  }
  func.func @transform_3(%arg0: i32) -> (i32, i32) {
    %c0_i32 = arith.constant 0 : i32
    %c0_i32_0 = arith.constant 0 : i32
    %c0_i32_1 = arith.constant 0 : i32
    return %c0_i32, %c0_i32_0 : i32, i32
  }
  func.func @transform_4(%arg0: i32) -> (i32, i32) {
    %c0_i32 = arith.constant 0 : i32
    %c0_i32_0 = arith.constant 0 : i32
    %c0_i32_1 = arith.constant 0 : i32
    return %c0_i32, %c0_i32_0 : i32, i32
  }
  func.func @transform_5(%arg0: i32) -> (i32, i32) {
    %c0_i32 = arith.constant 0 : i32
    %c0_i32_0 = arith.constant 0 : i32
    return %arg0, %c0_i32 : i32, i32
  }
}

</mosaic_0001>

<llo_original>
// kernel: tpu_custom_call.1
$region0: #{tpu_custom_call.1}
  #allocation0 [shape = 'u32[]', space=smem, size = 0x4, offset = 0x4, fixed_abs, tag = 'smem constant byte address 0x4 - core index']
  #allocation1 [shape = 'u32[144,128]{1,0:T(1,128)}', space=vmem, size = 0x12000, scoped, tag = 'internal scratch']
  %s0 = inlined_call_operand.hbm [shape: f32[16,128], index: 0, kind: input, shape index: {}]
  %s1 = inlined_call_operand.hbm [shape: bf16[128,256], index: 1, kind: input, shape index: {}]
  %s2 = inlined_call_operand.vmem [shape: f32[1,256], index: 2, kind: input, shape index: {}]
  %s3 = inlined_call_operand.hbm [shape: bf16[128,128], index: 3, kind: input, shape index: {}]
  %s4 = inlined_call_operand.vmem [shape: f32[1,128], index: 4, kind: input, shape index: {}]
  %s5 = inlined_call_operand.hbm [shape: f32[16,128], index: 5, kind: output, shape index: {}]
  %s6 = sld [smem:[#allocation0]]
  $region42: #{tpu_custom_call.1} parent=0
    _
  %s8 = ssub.s32 1, %s6
  %s9 = scalar_select 0, %s8, %s6
  $region1: #{tpu_custom_call.1} parent=0
    #allocation2 [shape = 'u8[8192]{0}', space=vmem, size = 0x2000, scoped, tag = 'input window, operand 0, single buffered']
    #allocation3 [shape = 's32[1]{0}', space=sflag, size = 0x4, scoped, tag = 'scoped memory for tpu_custom_call.1']
    #allocation4 [shape = 's32[1]{0}', space=sflag, size = 0x4, scoped, tag = 'scoped memory for tpu_custom_call.1']
    #allocation5 [shape = 'u8[65536]{0}', space=vmem, size = 0x10000, scoped, tag = 'input window, operand 1, single buffered']
    #allocation6 [shape = 's32[1]{0}', space=sflag, size = 0x4, scoped, tag = 'scoped memory for tpu_custom_call.1']
    #allocation7 [shape = 'u8[32768]{0}', space=vmem, size = 0x8000, scoped, tag = 'input window, operand 3, single buffered']
    #allocation8 [shape = 'u8[8192]{0}', space=vmem, size = 0x2000, scoped, tag = 'output window, operand 0, single buffered']
    %10 = vsyncpa [#allocation3], 0
    %11 = vsyncpa [#allocation6], 0
    %12 = vsyncpa [#allocation4], 0
    // Predicated region
    $region2: #{tpu_custom_call.1} parent=1 // pred_check
      _
    $region3: #{tpu_custom_call.1} parent=1 // pred_check_branch
      %14 = sbr.rel (0) target = $region5
    $region4: #{tpu_custom_call.1} parent=1 // pred_region
      %s16 = ssub.s32 256, 256
      %17 = vsyncadd [#allocation3], %s16
      %s18 = sshll.u32 [#allocation2], 4
      %s19 = int_to_ptr.vmem [resolvable:$true] %s18
      %24 = dma.hbm_to_vmem [thread:$0]  %s0, 256, %s19, [#allocation3], 128, 128, 8
    $region5: #{tpu_custom_call.1} parent=1 // pred_fallthru
      _
    // Predicated region
    $region6: #{tpu_custom_call.1} parent=1 // pred_check
      _
    $region7: #{tpu_custom_call.1} parent=1 // pred_check_branch
      %26 = sbr.rel (0) target = $region9
    $region8: #{tpu_custom_call.1} parent=1 // pred_region
      %s28 = ssub.s32 2048, 2048
      %29 = vsyncadd [#allocation6], %s28
      %s30 = sshll.u32 [#allocation5], 4
      %s31 = int_to_ptr.vmem [resolvable:$true] %s30
      %36 = dma.hbm_to_vmem [thread:$0]  %s1, 2048, %s31, [#allocation6], 128, 128, 8
    $region9: #{tpu_custom_call.1} parent=1 // pred_fallthru
      _
    // Predicated region
    $region10: #{tpu_custom_call.1} parent=1 // pred_check
      _
    $region11: #{tpu_custom_call.1} parent=1 // pred_check_branch
      %38 = sbr.rel (0) target = $region13
    $region12: #{tpu_custom_call.1} parent=1 // pred_region
      _
    $region13: #{tpu_custom_call.1} parent=1 // pred_fallthru
      _
    // Predicated region
    $region14: #{tpu_custom_call.1} parent=1 // pred_check
      _
    $region15: #{tpu_custom_call.1} parent=1 // pred_check_branch
      %40 = sbr.rel (0) target = $region17
    $region16: #{tpu_custom_call.1} parent=1 // pred_region
      %s42 = ssub.s32 1024, 1024
      %43 = vsyncadd [#allocation6], %s42
      %s44 = sshll.u32 [#allocation7], 4
      %s45 = int_to_ptr.vmem [resolvable:$true] %s44
      %50 = dma.hbm_to_vmem [thread:$0]  %s3, 1024, %s45, [#allocation6], 64, 64, 4
    $region17: #{tpu_custom_call.1} parent=1 // pred_fallthru
      _
    // Predicated region
    $region18: #{tpu_custom_call.1} parent=1 // pred_check
      _
    $region19: #{tpu_custom_call.1} parent=1 // pred_check_branch
      %52 = sbr.rel (0) target = $region21
    $region20: #{tpu_custom_call.1} parent=1 // pred_region
      _
    $region21: #{tpu_custom_call.1} parent=1 // pred_fallthru
      _
    // Predicated region
    $region22: #{tpu_custom_call.1} parent=1 // pred_check
      _
    $region23: #{tpu_custom_call.1} parent=1 // pred_check_branch
      %54 = sbr.rel (0) target = $region25
    $region24: #{tpu_custom_call.1} parent=1 // pred_region
      %55 = dma.done [#allocation3], 256
    $region25: #{tpu_custom_call.1} parent=1 // pred_fallthru
      _
    // Predicated region
    $region26: #{tpu_custom_call.1} parent=1 // pred_check
      _
    $region27: #{tpu_custom_call.1} parent=1 // pred_check_branch
      %57 = sbr.rel (0) target = $region29
    $region28: #{tpu_custom_call.1} parent=1 // pred_region
      %58 = dma.done [#allocation6], 2048
    $region29: #{tpu_custom_call.1} parent=1 // pred_fallthru
      _
    // Predicated region
    $region30: #{tpu_custom_call.1} parent=1 // pred_check
      _
    $region31: #{tpu_custom_call.1} parent=1 // pred_check_branch
      %60 = sbr.rel (0) target = $region33
    $region32: #{tpu_custom_call.1} parent=1 // pred_region
      %61 = dma.done [#allocation6], 1024
    $region33: #{tpu_custom_call.1} parent=1 // pred_fallthru
      _
    %v63 = vld [vmem:[#allocation2] sm:$0xff]
    %v64 = vld [vmem:[#allocation2 + $0x8] sm:$0xff]
    %v65 = vpack.c.bf16 %v64, %v63
    %v66 = vld [vmem:[#allocation5] sm:$0xf]
    %v67 = vld [vmem:[#allocation5 + $0x8] sm:$0xf]
    %v68 = vld [vmem:[#allocation5 + $0x10] sm:$0xf]
    %v69 = vld [vmem:[#allocation5 + $0x18] sm:$0xf]
    %v70 = vld [vmem:[#allocation5 + $0x20] sm:$0xf]
    %v71 = vld [vmem:[#allocation5 + $0x28] sm:$0xf]
    %v72 = vld [vmem:[#allocation5 + $0x30] sm:$0xf]
    %v73 = vld [vmem:[#allocation5 + $0x38] sm:$0xf]
    %v74 = vld [vmem:[#allocation5 + $0x40] sm:$0xf]
    %v75 = vld [vmem:[#allocation5 + $0x48] sm:$0xf]
    %v76 = vld [vmem:[#allocation5 + $0x50] sm:$0xf]
    %v77 = vld [vmem:[#allocation5 + $0x58] sm:$0xf]
    %v78 = vld [vmem:[#allocation5 + $0x60] sm:$0xf]
    %v79 = vld [vmem:[#allocation5 + $0x68] sm:$0xf]
    %v80 = vld [vmem:[#allocation5 + $0x70] sm:$0xf]
    %v81 = vld [vmem:[#allocation5 + $0x78] sm:$0xf]
    %v82 = vld [vmem:[%s2] sm:$0x1]
    %v84 = vlaneseq
    %v85 = vshrl.u32 %v84, 7
    %v86 = vsub.s32 0, %v85
    %v87 = vrot.slane %v82, %v86
    %v105 = vunpack.c.l.b16 %v66
    %v106 = vunpack.c.l.b16 %v67
    %v107 = vunpack.c.l.b16 %v68
    %v108 = vunpack.c.l.b16 %v69
    %v109 = vunpack.c.l.b16 %v70
    %v110 = vunpack.c.l.b16 %v71
    %v111 = vunpack.c.l.b16 %v72
    %v112 = vunpack.c.l.b16 %v73
    %v113 = vunpack.c.l.b16 %v74
    %v114 = vunpack.c.l.b16 %v75
    %v115 = vunpack.c.l.b16 %v76
    %v116 = vunpack.c.l.b16 %v77
    %v117 = vunpack.c.l.b16 %v78
    %v118 = vunpack.c.l.b16 %v79
    %v119 = vunpack.c.l.b16 %v80
    %v120 = vunpack.c.l.b16 %v81
    %v121 = vpack.c.b16 %v106, %v105
    %v122 = vpack.c.b16 %v108, %v107
    %v123 = vpack.c.b16 %v110, %v109
    %v124 = vpack.c.b16 %v112, %v111
    %v125 = vpack.c.b16 %v114, %v113
    %v126 = vpack.c.b16 %v116, %v115
    %v127 = vpack.c.b16 %v118, %v117
    %v128 = vpack.c.b16 %v120, %v119
    %137 = vmatprep.subr.bf16.mxu0 0
    %138 = vmatpush1.bf16.msra.mxu0 %v121
    %139 = vmatprep.subr.bf16.mxu0 0
    %140 = vmatpush1.bf16.msra.mxu0 %v122
    %141 = vmatprep.subr.bf16.mxu0 0
    %142 = vmatpush1.bf16.msra.mxu0 %v123
    %143 = vmatprep.subr.bf16.mxu0 0
    %144 = vmatpush1.bf16.msra.mxu0 %v124
    %145 = vmatprep.subr.bf16.mxu0 0
    %146 = vmatpush1.bf16.msra.mxu0 %v125
    %147 = vmatprep.subr.bf16.mxu0 0
    %148 = vmatpush1.bf16.msra.mxu0 %v126
    %149 = vmatprep.subr.bf16.mxu0 0
    %150 = vmatpush1.bf16.msra.mxu0 %v127
    %151 = vmatprep.subr.bf16.mxu0 0
    %152 = vmatpush1.bf16.msra.mxu0 %v128
    %153 = vmatprep.subr.bf16.mxu0 0
    %154 = vmatpush1.bf16.msra.mxu0 0
    %155 = vmatprep.subr.bf16.mxu0 0
    %156 = vmatpush1.bf16.msra.mxu0 0
    %157 = vmatprep.subr.bf16.mxu0 0
    %158 = vmatpush1.bf16.msra.mxu0 0
    %159 = vmatprep.subr.bf16.mxu0 0
    %160 = vmatpush1.bf16.msra.mxu0 0
    %161 = vmatprep.subr.bf16.mxu0 0
    %162 = vmatpush1.bf16.msra.mxu0 0
    %163 = vmatprep.subr.bf16.mxu0 0
    %164 = vmatpush1.bf16.msra.mxu0 0
    %165 = vmatprep.subr.bf16.mxu0 0
    %166 = vmatpush1.bf16.msra.mxu0 0
    %167 = vmatprep.subr.bf16.mxu0 0
    %168 = vmatpush1.bf16.msra.mxu0 0
    %169 = vmatprep.mubr.bf16.mxu0 0
    %170 = vmatmul.mubr.bf16.gmra.mrb[0].mxu0 %v65
    %v171 = vpop.f32.mrb[0].mxu0
    %v172 = vadd.f32 %v87, %v171
    %v173 = vpop.f32.mrb[0].mxu0
    %v174 = vpop.f32.mrb[0].mxu0
    %v175 = vadd.f32 %v87, %v174
    %v176 = vpop.f32.mrb[0].mxu0
    %177 = vdwg.mxu0
    %v178 = vmax.f32 %v172, 0.0
    %v179 = vmax.f32 %v175, 0.0
    %v180 = vld [vmem:[#allocation5 + $0x4] sm:$0xf]
    %v181 = vld [vmem:[#allocation5 + $0xc] sm:$0xf]
    %v182 = vld [vmem:[#allocation5 + $0x14] sm:$0xf]
    %v183 = vld [vmem:[#allocation5 + $0x1c] sm:$0xf]
    %v184 = vld [vmem:[#allocation5 + $0x24] sm:$0xf]
    %v185 = vld [vmem:[#allocation5 + $0x2c] sm:$0xf]
    %v186 = vld [vmem:[#allocation5 + $0x34] sm:$0xf]
    %v187 = vld [vmem:[#allocation5 + $0x3c] sm:$0xf]
    %v188 = vld [vmem:[#allocation5 + $0x44] sm:$0xf]
    %v189 = vld [vmem:[#allocation5 + $0x4c] sm:$0xf]
    %v190 = vld [vmem:[#allocation5 + $0x54] sm:$0xf]
    %v191 = vld [vmem:[#allocation5 + $0x5c] sm:$0xf]
    %v192 = vld [vmem:[#allocation5 + $0x64] sm:$0xf]
    %v193 = vld [vmem:[#allocation5 + $0x6c] sm:$0xf]
    %v194 = vld [vmem:[#allocation5 + $0x74] sm:$0xf]
    %v195 = vld [vmem:[#allocation5 + $0x7c] sm:$0xf]
    %v196 = vld [vmem:[%s2 + $0x1] sm:$0x1]
    %v198 = vlaneseq
    %v199 = vshrl.u32 %v198, 7
    %v200 = vsub.s32 0, %v199
    %v201 = vrot.slane %v196, %v200
    %v219 = vunpack.c.l.b16 %v180
    %v220 = vunpack.c.l.b16 %v181
    %v221 = vunpack.c.l.b16 %v182
    %v222 = vunpack.c.l.b16 %v183
    %v223 = vunpack.c.l.b16 %v184
    %v224 = vunpack.c.l.b16 %v185
    %v225 = vunpack.c.l.b16 %v186
    %v226 = vunpack.c.l.b16 %v187
    %v227 = vunpack.c.l.b16 %v188
    %v228 = vunpack.c.l.b16 %v189
    %v229 = vunpack.c.l.b16 %v190
    %v230 = vunpack.c.l.b16 %v191
    %v231 = vunpack.c.l.b16 %v192
    %v232 = vunpack.c.l.b16 %v193
    %v233 = vunpack.c.l.b16 %v194
    %v234 = vunpack.c.l.b16 %v195
    %v235 = vpack.c.b16 %v220, %v219
    %v236 = vpack.c.b16 %v222, %v221
    %v237 = vpack.c.b16 %v224, %v223
    %v238 = vpack.c.b16 %v226, %v225
    %v239 = vpack.c.b16 %v228, %v227
    %v240 = vpack.c.b16 %v230, %v229
    %v241 = vpack.c.b16 %v232, %v231
    %v242 = vpack.c.b16 %v234, %v233
    %251 = vmatprep.subr.bf16.mxu0 0
    %252 = vmatpush1.bf16.msra.mxu0 %v235
    %253 = vmatprep.subr.bf16.mxu0 0
    %254 = vmatpush1.bf16.msra.mxu0 %v236
    %255 = vmatprep.subr.bf16.mxu0 0
    %256 = vmatpush1.bf16.msra.mxu0 %v237
    %257 = vmatprep.subr.bf16.mxu0 0
    %258 = vmatpush1.bf16.msra.mxu0 %v238
    %259 = vmatprep.subr.bf16.mxu0 0
    %260 = vmatpush1.bf16.msra.mxu0 %v239
    %261 = vmatprep.subr.bf16.mxu0 0
    %262 = vmatpush1.bf16.msra.mxu0 %v240
    %263 = vmatprep.subr.bf16.mxu0 0
    %264 = vmatpush1.bf16.msra.mxu0 %v241
    %265 = vmatprep.subr.bf16.mxu0 0
    %266 = vmatpush1.bf16.msra.mxu0 %v242
    %267 = vmatprep.subr.bf16.mxu0 0
    %268 = vmatpush1.bf16.msra.mxu0 0
    %269 = vmatprep.subr.bf16.mxu0 0
    %270 = vmatpush1.bf16.msra.mxu0 0
    %271 = vmatprep.subr.bf16.mxu0 0
    %272 = vmatpush1.bf16.msra.mxu0 0
    %273 = vmatprep.subr.bf16.mxu0 0
    %274 = vmatpush1.bf16.msra.mxu0 0
    %275 = vmatprep.subr.bf16.mxu0 0
    %276 = vmatpush1.bf16.msra.mxu0 0
    %277 = vmatprep.subr.bf16.mxu0 0
    %278 = vmatpush1.bf16.msra.mxu0 0
    %279 = vmatprep.subr.bf16.mxu0 0
    %280 = vmatpush1.bf16.msra.mxu0 0
    %281 = vmatprep.subr.bf16.mxu0 0
    %282 = vmatpush1.bf16.msra.mxu0 0
    %283 = vmatprep.mubr.bf16.mxu0 0
    %284 = vmatmul.mubr.bf16.gmra.mrb[0].mxu0 %v65
    %v285 = vpop.f32.mrb[0].mxu0
    %v286 = vadd.f32 %v201, %v285
    %v287 = vpop.f32.mrb[0].mxu0
    %v288 = vpop.f32.mrb[0].mxu0
    %v289 = vadd.f32 %v201, %v288
    %v290 = vpop.f32.mrb[0].mxu0
    %291 = vdwg.mxu0
    %v292 = vpack.c.bf16 %v179, %v178
    %v293 = vld [vmem:[#allocation7] sm:$0xf]
    %v294 = vld [vmem:[#allocation7 + $0x4] sm:$0xf]
    %v295 = vld [vmem:[#allocation7 + $0x8] sm:$0xf]
    %v296 = vld [vmem:[#allocation7 + $0xc] sm:$0xf]
    %v297 = vld [vmem:[#allocation7 + $0x10] sm:$0xf]
    %v298 = vld [vmem:[#allocation7 + $0x14] sm:$0xf]
    %v299 = vld [vmem:[#allocation7 + $0x18] sm:$0xf]
    %v300 = vld [vmem:[#allocation7 + $0x1c] sm:$0xf]
    %v301 = vld [vmem:[#allocation7 + $0x20] sm:$0xf]
    %v302 = vld [vmem:[#allocation7 + $0x24] sm:$0xf]
    %v303 = vld [vmem:[#allocation7 + $0x28] sm:$0xf]
    %v304 = vld [vmem:[#allocation7 + $0x2c] sm:$0xf]
    %v305 = vld [vmem:[#allocation7 + $0x30] sm:$0xf]
    %v306 = vld [vmem:[#allocation7 + $0x34] sm:$0xf]
    %v307 = vld [vmem:[#allocation7 + $0x38] sm:$0xf]
    %v308 = vld [vmem:[#allocation7 + $0x3c] sm:$0xf]
    %v309 = vld [vmem:[%s4] sm:$0x1]
    %v311 = vlaneseq
    %v312 = vshrl.u32 %v311, 7
    %v313 = vsub.s32 0, %v312
    %v314 = vrot.slane %v309, %v313
    %v332 = vunpack.c.l.b16 %v293
    %v333 = vunpack.c.l.b16 %v294
    %v334 = vunpack.c.l.b16 %v295
    %v335 = vunpack.c.l.b16 %v296
    %v336 = vunpack.c.l.b16 %v297
    %v337 = vunpack.c.l.b16 %v298
    %v338 = vunpack.c.l.b16 %v299
    %v339 = vunpack.c.l.b16 %v300
    %v340 = vunpack.c.l.b16 %v301
    %v341 = vunpack.c.l.b16 %v302
    %v342 = vunpack.c.l.b16 %v303
    %v343 = vunpack.c.l.b16 %v304
    %v344 = vunpack.c.l.b16 %v305
    %v345 = vunpack.c.l.b16 %v306
    %v346 = vunpack.c.l.b16 %v307
    %v347 = vunpack.c.l.b16 %v308
    %v348 = vpack.c.b16 %v333, %v332
    %v349 = vpack.c.b16 %v335, %v334
    %v350 = vpack.c.b16 %v337, %v336
    %v351 = vpack.c.b16 %v339, %v338
    %v352 = vpack.c.b16 %v341, %v340
    %v353 = vpack.c.b16 %v343, %v342
    %v354 = vpack.c.b16 %v345, %v344
    %v355 = vpack.c.b16 %v347, %v346
    %364 = vmatprep.subr.bf16.mxu0 0
    %365 = vmatpush1.bf16.msra.mxu0 %v348
    %366 = vmatprep.subr.bf16.mxu0 0
    %367 = vmatpush1.bf16.msra.mxu0 %v349
    %368 = vmatprep.subr.bf16.mxu0 0
    %369 = vmatpush1.bf16.msra.mxu0 %v350
    %370 = vmatprep.subr.bf16.mxu0 0
    %371 = vmatpush1.bf16.msra.mxu0 %v351
    %372 = vmatprep.subr.bf16.mxu0 0
    %373 = vmatpush1.bf16.msra.mxu0 %v352
    %374 = vmatprep.subr.bf16.mxu0 0
    %375 = vmatpush1.bf16.msra.mxu0 %v353
    %376 = vmatprep.subr.bf16.mxu0 0
    %377 = vmatpush1.bf16.msra.mxu0 %v354
    %378 = vmatprep.subr.bf16.mxu0 0
    %379 = vmatpush1.bf16.msra.mxu0 %v355
    %380 = vmatprep.subr.bf16.mxu0 0
    %381 = vmatpush1.bf16.msra.mxu0 0
    %382 = vmatprep.subr.bf16.mxu0 0
    %383 = vmatpush1.bf16.msra.mxu0 0
    %384 = vmatprep.subr.bf16.mxu0 0
    %385 = vmatpush1.bf16.msra.mxu0 0
    %386 = vmatprep.subr.bf16.mxu0 0
    %387 = vmatpush1.bf16.msra.mxu0 0
    %388 = vmatprep.subr.bf16.mxu0 0
    %389 = vmatpush1.bf16.msra.mxu0 0
    %390 = vmatprep.subr.bf16.mxu0 0
    %391 = vmatpush1.bf16.msra.mxu0 0
    %392 = vmatprep.subr.bf16.mxu0 0
    %393 = vmatpush1.bf16.msra.mxu0 0
    %394 = vmatprep.subr.bf16.mxu0 0
    %395 = vmatpush1.bf16.msra.mxu0 0
    %396 = vmatprep.mubr.bf16.mxu0 0
    %397 = vmatmul.mubr.bf16.gmra.mrb[0].mxu0 %v292
    %v398 = vpop.f32.mrb[0].mxu0
    %v399 = vadd.f32 %v314, %v398
    %v400 = vpop.f32.mrb[0].mxu0
    %v401 = vpop.f32.mrb[0].mxu0
    %v402 = vadd.f32 %v314, %v401
    %v403 = vpop.f32.mrb[0].mxu0
    %404 = vdwg.mxu0
    %v405 = vadd.f32 %v399, %v286
    %v406 = vadd.f32 %v402, %v289
    %v407 = vmax.f32 %v405, 0.0
    %v408 = vmax.f32 %v406, 0.0
    %409 = vst [vmem:[#allocation8] sm:$0xff] %v407
    %410 = vst [vmem:[#allocation8 + $0x8] sm:$0xff] %v408
    // Predicated region
    $region34: #{tpu_custom_call.1} parent=1 // pred_check
      _
    $region35: #{tpu_custom_call.1} parent=1 // pred_check_branch
      %412 = sbr.rel (0) target = $region37
    $region36: #{tpu_custom_call.1} parent=1 // pred_region
      %s414 = ssub.s32 256, 256
      %415 = vsyncadd [#allocation4], %s414
      %s416 = sshll.u32 [#allocation8], 4
      %s417 = int_to_ptr.vmem [resolvable:$true] %s416
      %422 = dma.vmem_to_hbm [thread:$0]  %s417, 256, %s5, [#allocation4], 128, 128, 8
    $region37: #{tpu_custom_call.1} parent=1 // pred_fallthru
      _
    // Predicated region
    $region38: #{tpu_custom_call.1} parent=1 // pred_check
      _
    $region39: #{tpu_custom_call.1} parent=1 // pred_check_branch
      %424 = sbr.rel (0) target = $region41
    $region40: #{tpu_custom_call.1} parent=1 // pred_region
      %425 = dma.done [#allocation4], 256
    $region41: #{tpu_custom_call.1} parent=1 // pred_fallthru
      _
    %426 = vsyncpa [#allocation3], 1
    %427 = vsyncpa [#allocation6], 1
    %428 = vsyncpa [#allocation4], 1

</llo_original>
